<compile_context>
chip_gen: v7x
topology: tpu7x:2x2x1
jax: 0.10.0
libtpu: 0.0.40
codegen_flags: <defaults>
</compile_context>

<pallas_src>
import math

import jax
import jax.numpy as jnp
from jax import lax
from jax.experimental import pallas as pl
from jax.experimental.pallas import tpu as pltpu

_INV_SQRT2 = 1.0 / math.sqrt(2.0)


def _gelu_exact(h):
    # Exact (erf) GELU — matches nn.GELU() default.
    return 0.5 * h * (1.0 + lax.erf(h * _INV_SQRT2))


def _ffn_kernel_scratch(x_ref, w1_ref, b1_ref, w2_ref, b2_ref, o_ref, acc_ref):
    """Variant with an f32 VMEM accumulator (used when output dtype != f32)."""
    k = pl.program_id(1)

    @pl.when(k == 0)
    def _():
        acc_ref[...] = jnp.zeros_like(acc_ref)

    x = x_ref[...]                                                    # (tm, dim), compute dtype
    h = jnp.dot(x, w1_ref[...], preferred_element_type=jnp.float32)   # (tm, th) f32
    h = _gelu_exact(h + b1_ref[...].astype(jnp.float32))
    # Dropout(p=0.0) layers are the identity -> no-op.
    acc_ref[...] += jnp.dot(h.astype(x.dtype), w2_ref[...],
                            preferred_element_type=jnp.float32)

    @pl.when(k == pl.num_programs(1) - 1)
    def _():
        o_ref[...] = (acc_ref[...] + b2_ref[...].astype(jnp.float32)
                      ).astype(o_ref.dtype)


def _ffn_kernel_direct(x_ref, w1_ref, b1_ref, w2_ref, b2_ref, o_ref):
    """f32-output variant: accumulate straight into the resident output block."""
    k = pl.program_id(1)

    x = x_ref[...]
    h = jnp.dot(x, w1_ref[...], preferred_element_type=jnp.float32)
    h = _gelu_exact(h + b1_ref[...].astype(jnp.float32))
    part = jnp.dot(h.astype(x.dtype), w2_ref[...],
                   preferred_element_type=jnp.float32)

    @pl.when(k == 0)
    def _():
        o_ref[...] = part + b2_ref[...].astype(jnp.float32)

    @pl.when(k > 0)
    def _():
        o_ref[...] += part


def _round_up(x, m):
    return ((x + m - 1) // m) * m


def _vmem_limit_bytes():
    """~85% of physical VMEM, capped at 104 MiB; conservative 64 MiB fallback."""
    cap = None
    try:
        info = pltpu.get_tpu_info()
        cap = getattr(info, "vmem_capacity_bytes", None)
    except Exception:
        cap = None
    if not cap:
        cap = 64 * 1024 * 1024          # v7x-safe fallback
    return min(int(cap * 0.85), 104 * 1024 * 1024)


def _select_tiles(M, dim, hidden, compute_itemsize, out_itemsize, vmem_limit):
    """Pick (tm, th, M_pad, hidden_pad, use_scratch) under the VMEM budget."""
    target_th = 512
    if hidden <= target_th:
        th, hidden_pad = hidden, hidden            # full axis: always legal
    else:
        th = target_th                             # 256-aligned strip
        hidden_pad = _round_up(hidden, th)

    use_scratch = out_itemsize != 4
    budget = int(vmem_limit * 0.9)

    def fits(tm):
        x_buf = 2 * tm * dim * compute_itemsize        # double-buffered x tile
        o_buf = 2 * tm * dim * out_itemsize            # double-buffered out tile
        w_buf = 2 * (dim * th + th * dim) * compute_itemsize
        b_buf = 2 * (th + dim) * 4
        acc = tm * dim * 4 if use_scratch else 0
        return x_buf + o_buf + w_buf + b_buf + acc <= budget

    tm_cap = 16
    for cand in (1024, 768, 512, 384, 256, 192, 128, 64, 32, 16):
        if fits(cand):
            tm_cap = cand
            break

    M_aligned = _round_up(M, 16)                   # bf16 sublane packing = 16
    if M_aligned <= tm_cap:
        if M_aligned >= 256:
            # Enough work: keep >= 2 row tiles so both v7x TensorCores run.
            tm = _round_up(pl.cdiv(M_aligned, 2), 16)
        else:
            tm = M_aligned
    else:
        tm = tm_cap
    M_pad = _round_up(M, tm)
    return tm, th, M_pad, hidden_pad, use_scratch


def feed_forward(x, w1, b1, w2, b2, *, compute_dtype=jnp.bfloat16, out_dtype=None):
    """x: (..., dim); w1: (dim, hidden); b1: (hidden,); w2: (hidden, dim); b2: (dim,)."""
    orig_shape = x.shape
    dim = orig_shape[-1]
    hidden = w1.shape[1]
    M = 1
    for s in orig_shape[:-1]:
        M *= s
    out_dtype = x.dtype if out_dtype is None else out_dtype

    compute_itemsize = jnp.dtype(compute_dtype).itemsize
    out_itemsize = jnp.dtype(out_dtype).itemsize
    vmem_limit = _vmem_limit_bytes()

    tm, th, M_pad, hidden_pad, use_scratch = _select_tiles(
        M, dim, hidden, compute_itemsize, out_itemsize, vmem_limit)

    # Cast activations/weights to the MXU compute dtype at the boundary (f32 acc).
    x2d = x.reshape(M, dim).astype(compute_dtype)
    if M_pad > M:
        x2d = jnp.pad(x2d, ((0, M_pad - M), (0, 0)))

    w1c = w1.astype(compute_dtype)
    w2c = w2.astype(compute_dtype)
    b1f = b1.astype(jnp.float32)
    b2f = b2.astype(jnp.float32)
    if hidden_pad > hidden:
        # Zero padding is exact: padded hidden units contribute gelu(0)*0 = 0.
        w1c = jnp.pad(w1c, ((0, 0), (0, hidden_pad - hidden)))
        b1f = jnp.pad(b1f, ((0, hidden_pad - hidden),))
        w2c = jnp.pad(w2c, ((0, hidden_pad - hidden), (0, 0)))
    b1_2d = b1f.reshape(1, hidden_pad)
    b2_2d = b2f.reshape(1, dim)

    grid = (M_pad // tm, hidden_pad // th)
    n_row_tiles = grid[0]

    cost = pl.CostEstimate(
        flops=4 * M_pad * dim * hidden_pad,                 # two matmuls
        transcendentals=M_pad * hidden_pad,                 # erf in GELU
        bytes_accessed=(M_pad * dim * compute_itemsize      # x read
                        + M_pad * dim * out_itemsize        # out write
                        + n_row_tiles * (w1c.size + w2c.size) * compute_itemsize
                        + n_row_tiles * (b1_2d.size + b2_2d.size) * 4),
    )

    kernel = _ffn_kernel_scratch if use_scratch else _ffn_kernel_direct
    scratch_shapes = [pltpu.VMEM((tm, dim), jnp.float32)] if use_scratch else []

    out = pl.pallas_call(
        kernel,
        out_shape=jax.ShapeDtypeStruct((M_pad, dim), out_dtype),
        grid_spec=pltpu.PrefetchScalarGridSpec(
            num_scalar_prefetch=0,
            grid=grid,
            in_specs=[
                pl.BlockSpec((tm, dim), lambda i, k: (i, 0)),   # x tile (resident over k)
                pl.BlockSpec((dim, th), lambda i, k: (0, k)),   # W1 column strip
                pl.BlockSpec((1, th), lambda i, k: (0, k)),     # b1 strip
                pl.BlockSpec((th, dim), lambda i, k: (k, 0)),   # W2 row strip
                pl.BlockSpec((1, dim), lambda i, k: (0, 0)),    # b2
            ],
            out_specs=pl.BlockSpec((tm, dim), lambda i, k: (i, 0)),
            scratch_shapes=scratch_shapes,
        ),
        compiler_params=pltpu.CompilerParams(
            dimension_semantics=("parallel", "arbitrary"),
            vmem_limit_bytes=vmem_limit,
        ),
        cost_estimate=cost,
    )(x2d, w1c, b1_2d, w2c, b2_2d)

    return out[:M].reshape(orig_shape).astype(out_dtype)


if __name__ == "__main__":
    # Small shapes implied by the module: tokens of width `dim`.
    batch, seq, dim, hidden_dim = 2, 8, 32, 64

    key = jax.random.PRNGKey(0)
    kx, kw1, kb1, kw2, kb2 = jax.random.split(key, 5)

    x = jax.random.normal(kx, (batch, seq, dim), dtype=jnp.float32)

    # Deterministic init mimicking nn.Linear's uniform(-1/sqrt(fan_in), ...).
    lim1 = 1.0 / math.sqrt(dim)
    lim2 = 1.0 / math.sqrt(hidden_dim)
    w1 = jax.random.uniform(kw1, (dim, hidden_dim), jnp.float32, -lim1, lim1)
    b1 = jax.random.uniform(kb1, (hidden_dim,), jnp.float32, -lim1, lim1)
    w2 = jax.random.uniform(kw2, (hidden_dim, dim), jnp.float32, -lim2, lim2)
    b2 = jax.random.uniform(kb2, (dim,), jnp.float32, -lim2, lim2)

    # Pure-JAX reference (exact erf GELU; dropout p=0 is identity).
    h_ref = x @ w1 + b1
    h_ref = 0.5 * h_ref * (1.0 + lax.erf(h_ref / jnp.sqrt(2.0)))
    y_ref = h_ref @ w2 + b2

    # f32 MXU path (direct-to-output accumulate): tight correctness check.
    y_f32 = feed_forward(x, w1, b1, w2, b2, compute_dtype=jnp.float32)
    jax.block_until_ready(y_f32)
    assert jnp.allclose(y_f32, y_ref, atol=1e-5, rtol=1e-5)

    # Default bf16-operand / f32-accumulate fast path (f32 out): loose tolerance.
    y_bf16 = feed_forward(x, w1, b1, w2, b2)
    jax.block_until_ready(y_bf16)
    assert jnp.allclose(y_bf16, y_ref, atol=3e-2, rtol=3e-2)

    # bf16-in / bf16-out path (exercises the f32-scratch accumulator variant).
    y_b16io = feed_forward(x.astype(jnp.bfloat16), w1, b1, w2, b2)
    jax.block_until_ready(y_b16io)
    assert y_b16io.dtype == jnp.bfloat16
    assert jnp.allclose(y_b16io.astype(jnp.float32), y_ref, atol=1e-1, rtol=1e-1)

    print("KERNEL_OK")
</pallas_src>

<mosaic_0001>
module attributes {stable_mosaic.version = 11 : i64} {
  func.func @_ffn_kernel_direct(%arg0: i32, %arg1: i32, %arg2: memref<16x32xf32, #tpu.memory_space<vmem>>, %arg3: memref<32x64xf32, #tpu.memory_space<vmem>>, %arg4: memref<1x64xf32, #tpu.memory_space<vmem>>, %arg5: memref<64x32xf32, #tpu.memory_space<vmem>>, %arg6: memref<1x32xf32, #tpu.memory_space<vmem>>, %arg7: memref<16x32xf32, #tpu.memory_space<vmem>>) attributes {dimension_semantics = [#tpu.dimension_semantics<parallel>, #tpu.dimension_semantics<arbitrary>], iteration_bounds = array<i64: 1, 1>, scalar_prefetch = 0 : i64, scratch_operands = 0 : i64, tpu.core_type = #tpu.core_type<tc>, window_params = [{transform_indices = @transform_0, window_bounds = array<i64: 16, 32>}, {transform_indices = @transform_1, window_bounds = array<i64: 32, 64>}, {transform_indices = @transform_2, window_bounds = array<i64: 1, 64>}, {transform_indices = @transform_3, window_bounds = array<i64: 64, 32>}, {pipeline_mode = #tpu.pipeline_mode<synchronous>, transform_indices = @transform_4, window_bounds = array<i64: 1, 32>}, {transform_indices = @transform_5, window_bounds = array<i64: 16, 32>}]} {
    %c0 = arith.constant 0 : index
    %c0_0 = arith.constant 0 : index
    %0 = vector.load %arg2[%c0, %c0_0] : memref<16x32xf32, #tpu.memory_space<vmem>>, vector<16x32xf32>
    %c0_1 = arith.constant 0 : index
    %c0_2 = arith.constant 0 : index
    %1 = vector.load %arg3[%c0_1, %c0_2] : memref<32x64xf32, #tpu.memory_space<vmem>>, vector<32x64xf32>
    %cst = arith.constant dense<0.000000e+00> : vector<16x64xf32>
    %2 = tpu.matmul %0, %1, %cst {dimension_numbers = #tpu.dot_dimension_numbers<[1], [0], [0], [1], [0, 0, 1, 1], [], []>} : vector<16x32xf32>, vector<32x64xf32>, vector<16x64xf32> -> vector<16x64xf32>
    %c0_3 = arith.constant 0 : index
    %c0_4 = arith.constant 0 : index
    %3 = vector.load %arg4[%c0_3, %c0_4] : memref<1x64xf32, #tpu.memory_space<vmem>>, vector<1x64xf32>
    %4 = vector.broadcast %3 : vector<1x64xf32> to vector<16x64xf32>
    %5 = arith.addf %2, %4 : vector<16x64xf32>
    %cst_5 = arith.constant 5.000000e-01 : f32
    %6 = vector.broadcast %cst_5 : f32 to vector<16x64xf32>
    %7 = arith.mulf %6, %5 : vector<16x64xf32>
    %cst_6 = arith.constant 0.707106769 : f32
    %8 = vector.broadcast %cst_6 : f32 to vector<16x64xf32>
    %9 = arith.mulf %5, %8 : vector<16x64xf32>
    %10 = math.erf %9 : vector<16x64xf32>
    %cst_7 = arith.constant 1.000000e+00 : f32
    %11 = vector.broadcast %cst_7 : f32 to vector<16x64xf32>
    %12 = arith.addf %11, %10 : vector<16x64xf32>
    %13 = arith.mulf %7, %12 : vector<16x64xf32>
    %c0_8 = arith.constant 0 : index
    %c0_9 = arith.constant 0 : index
    %14 = vector.load %arg5[%c0_8, %c0_9] : memref<64x32xf32, #tpu.memory_space<vmem>>, vector<64x32xf32>
    %cst_10 = arith.constant dense<0.000000e+00> : vector<16x32xf32>
    %15 = tpu.matmul %13, %14, %cst_10 {dimension_numbers = #tpu.dot_dimension_numbers<[1], [0], [0], [1], [0, 0, 1, 1], [], []>} : vector<16x64xf32>, vector<64x32xf32>, vector<16x32xf32> -> vector<16x32xf32>
    %c0_i32 = arith.constant 0 : i32
    %16 = arith.cmpi eq, %arg1, %c0_i32 : i32
    %17 = arith.extui %16 : i1 to i32
    %c0_i32_11 = arith.constant 0 : i32
    %18 = arith.cmpi ne, %17, %c0_i32_11 : i32
    scf.if %18 {
      %c0_14 = arith.constant 0 : index
      %c0_15 = arith.constant 0 : index
      %22 = vector.load %arg6[%c0_14, %c0_15] : memref<1x32xf32, #tpu.memory_space<vmem>>, vector<1x32xf32>
      %23 = vector.broadcast %22 : vector<1x32xf32> to vector<16x32xf32>
      %24 = arith.addf %15, %23 : vector<16x32xf32>
      %c0_16 = arith.constant 0 : index
      %c0_17 = arith.constant 0 : index
      %25 = vector.load %arg7[%c0_16, %c0_17] : memref<16x32xf32, #tpu.memory_space<vmem>>, vector<16x32xf32>
      tpu.vector_store %arg7[%c0_16, %c0_17], %24 {strides = array<i32>} : memref<16x32xf32, #tpu.memory_space<vmem>>, vector<16x32xf32>,
    } else {
    }
    %c0_i32_12 = arith.constant 0 : i32
    %19 = arith.cmpi sgt, %arg1, %c0_i32_12 : i32
    %20 = arith.extui %19 : i1 to i32
    %c0_i32_13 = arith.constant 0 : i32
    %21 = arith.cmpi ne, %20, %c0_i32_13 : i32
    scf.if %21 {
      %c0_14 = arith.constant 0 : index
      %c0_15 = arith.constant 0 : index
      %22 = vector.load %arg7[%c0_14, %c0_15] : memref<16x32xf32, #tpu.memory_space<vmem>>, vector<16x32xf32>
      %23 = arith.addf %22, %15 : vector<16x32xf32>
      %c0_16 = arith.constant 0 : index
      %c0_17 = arith.constant 0 : index
      %24 = vector.load %arg7[%c0_16, %c0_17] : memref<16x32xf32, #tpu.memory_space<vmem>>, vector<16x32xf32>
      tpu.vector_store %arg7[%c0_16, %c0_17], %23 {strides = array<i32>} : memref<16x32xf32, #tpu.memory_space<vmem>>, vector<16x32xf32>,
    } else {
    }
    return
  }
  func.func @transform_0(%arg0: i32, %arg1: i32) -> (i32, i32) {
    %c0_i32 = arith.constant 0 : i32
    %c0_i32_0 = arith.constant 0 : i32
    return %arg0, %c0_i32 : i32, i32
  }
  func.func @transform_1(%arg0: i32, %arg1: i32) -> (i32, i32) {
    %c0_i32 = arith.constant 0 : i32
    %c0_i32_0 = arith.constant 0 : i32
    return %c0_i32, %arg1 : i32, i32
  }
  func.func @transform_2(%arg0: i32, %arg1: i32) -> (i32, i32) {
    %c0_i32 = arith.constant 0 : i32
    %c0_i32_0 = arith.constant 0 : i32
    return %c0_i32, %arg1 : i32, i32
  }
  func.func @transform_3(%arg0: i32, %arg1: i32) -> (i32, i32) {
    %c0_i32 = arith.constant 0 : i32
    %c0_i32_0 = arith.constant 0 : i32
    return %arg1, %c0_i32 : i32, i32
  }
  func.func @transform_4(%arg0: i32, %arg1: i32) -> (i32, i32) {
    %c0_i32 = arith.constant 0 : i32
    %c0_i32_0 = arith.constant 0 : i32
    %c0_i32_1 = arith.constant 0 : i32
    return %c0_i32, %c0_i32_0 : i32, i32
  }
  func.func @transform_5(%arg0: i32, %arg1: i32) -> (i32, i32) {
    %c0_i32 = arith.constant 0 : i32
    %c0_i32_0 = arith.constant 0 : i32
    return %arg0, %c0_i32 : i32, i32
  }
}

</mosaic_0001>

<llo_original>
// kernel: tpu_custom_call.1
$region0: #{tpu_custom_call.1}
  #allocation0 [shape = 'u32[]', space=smem, size = 0x4, offset = 0x4, fixed_abs, tag = 'smem constant byte address 0x4 - core index']
  #allocation1 [shape = 'u32[144,128]{1,0:T(1,128)}', space=vmem, size = 0x12000, scoped, tag = 'internal scratch']
  %s0 = inlined_call_operand.vmem [shape: f32[16,32], index: 0, kind: input, shape index: {}]
  %s1 = inlined_call_operand.vmem [shape: f32[32,64], index: 1, kind: input, shape index: {}]
  %s2 = inlined_call_operand.vmem [shape: f32[1,64], index: 2, kind: input, shape index: {}]
  %s3 = inlined_call_operand.vmem [shape: f32[64,32], index: 3, kind: input, shape index: {}]
  %s4 = inlined_call_operand.vmem [shape: f32[1,32], index: 4, kind: input, shape index: {}]
  %s5 = inlined_call_operand.hbm [shape: f32[16,32], index: 5, kind: output, shape index: {}]
  %s6 = sld [smem:[#allocation0]]
  $region38: #{tpu_custom_call.1} parent=0
    _
  %s8 = ssub.s32 1, %s6
  %s9 = scalar_select 0, %s8, %s6
  $region1: #{tpu_custom_call.1} parent=0
    #allocation2 [shape = 'u8[8192]{0}', space=vmem, size = 0x2000, scoped, tag = 'output window, operand 0, single buffered']
    #allocation3 [shape = 's32[1]{0}', space=sflag, size = 0x4, scoped, tag = 'scoped memory for tpu_custom_call.1']
    %10 = vsyncpa [#allocation3], 0
    // Predicated region
    $region2: #{tpu_custom_call.1} parent=1 // pred_check
      _
    $region3: #{tpu_custom_call.1} parent=1 // pred_check_branch
      %12 = sbr.rel (0) target = $region5
    $region4: #{tpu_custom_call.1} parent=1 // pred_region
      _
    $region5: #{tpu_custom_call.1} parent=1 // pred_fallthru
      _
    // Predicated region
    $region6: #{tpu_custom_call.1} parent=1 // pred_check
      _
    $region7: #{tpu_custom_call.1} parent=1 // pred_check_branch
      %14 = sbr.rel (0) target = $region9
    $region8: #{tpu_custom_call.1} parent=1 // pred_region
      _
    $region9: #{tpu_custom_call.1} parent=1 // pred_fallthru
      _
    // Predicated region
    $region10: #{tpu_custom_call.1} parent=1 // pred_check
      _
    $region11: #{tpu_custom_call.1} parent=1 // pred_check_branch
      %16 = sbr.rel (0) target = $region13
    $region12: #{tpu_custom_call.1} parent=1 // pred_region
      _
    $region13: #{tpu_custom_call.1} parent=1 // pred_fallthru
      _
    // Predicated region
    $region14: #{tpu_custom_call.1} parent=1 // pred_check
      _
    $region15: #{tpu_custom_call.1} parent=1 // pred_check_branch
      %18 = sbr.rel (0) target = $region17
    $region16: #{tpu_custom_call.1} parent=1 // pred_region
      _
    $region17: #{tpu_custom_call.1} parent=1 // pred_fallthru
      _
    // Predicated region
    $region18: #{tpu_custom_call.1} parent=1 // pred_check
      _
    $region19: #{tpu_custom_call.1} parent=1 // pred_check_branch
      %20 = sbr.rel (0) target = $region21
    $region20: #{tpu_custom_call.1} parent=1 // pred_region
      _
    $region21: #{tpu_custom_call.1} parent=1 // pred_fallthru
      _
    %v21 = vld [vmem:[%s0] sm:$0xff]
    %v22 = vld [vmem:[%s0 + $0x8] sm:$0xff]
    %v23 = vld [vmem:[%s1] sm:$0xff]
    %v24 = vld [vmem:[%s1 + $0x8] sm:$0xff]
    %v25 = vld [vmem:[%s1 + $0x10] sm:$0xff]
    %v26 = vld [vmem:[%s1 + $0x18] sm:$0xff]
    %v27 = vld [vmem:[%s2] sm:$0x1]
    %v29 = vlaneseq
    %v30 = vshrl.u32 %v29, 7
    %v31 = vsub.s32 0, %v30
    %v32 = vrot.slane %v27, %v31
    %vm34 = vcmask 261120
    %v36 = vsel %vm34, %v21, 0
    %v39 = vsel %vm34, %v22, 0
    %41 = vmatprep.subr.mxu0 0.0
    %42 = vmatpush1.msra.mxu0 %v23
    %43 = vmatprep.subr.mxu0 0.0
    %44 = vmatpush1.msra.mxu0 %v24
    %45 = vmatprep.subr.mxu0 0.0
    %46 = vmatpush1.msra.mxu0 %v25
    %47 = vmatprep.subr.mxu0 0.0
    %48 = vmatpush1.msra.mxu0 %v26
    %49 = vmatprep.subr.mxu0 0.0
    %50 = vmatpush1.msra.mxu0 0.0
    %51 = vmatprep.subr.mxu0 0.0
    %52 = vmatpush1.msra.mxu0 0.0
    %53 = vmatprep.subr.mxu0 0.0
    %54 = vmatpush1.msra.mxu0 0.0
    %55 = vmatprep.subr.mxu0 0.0
    %56 = vmatpush1.msra.mxu0 0.0
    %57 = vmatprep.subr.mxu0 0.0
    %58 = vmatpush1.msra.mxu0 0.0
    %59 = vmatprep.subr.mxu0 0.0
    %60 = vmatpush1.msra.mxu0 0.0
    %61 = vmatprep.subr.mxu0 0.0
    %62 = vmatpush1.msra.mxu0 0.0
    %63 = vmatprep.subr.mxu0 0.0
    %64 = vmatpush1.msra.mxu0 0.0
    %65 = vmatprep.subr.mxu0 0.0
    %66 = vmatpush1.msra.mxu0 0.0
    %67 = vmatprep.subr.mxu0 0.0
    %68 = vmatpush1.msra.mxu0 0.0
    %69 = vmatprep.subr.mxu0 0.0
    %70 = vmatpush1.msra.mxu0 0.0
    %71 = vmatprep.subr.mxu0 0.0
    %72 = vmatpush1.msra.mxu0 0.0
    %73 = vmatprep.subr.mxu0 0.0
    %74 = vmatpush1.msra.mxu0 0.0
    %75 = vmatprep.subr.mxu0 0.0
    %76 = vmatpush1.msra.mxu0 0.0
    %77 = vmatprep.subr.mxu0 0.0
    %78 = vmatpush1.msra.mxu0 0.0
    %79 = vmatprep.subr.mxu0 0.0
    %80 = vmatpush1.msra.mxu0 0.0
    %81 = vmatprep.subr.mxu0 0.0
    %82 = vmatpush1.msra.mxu0 0.0
    %83 = vmatprep.subr.mxu0 0.0
    %84 = vmatpush1.msra.mxu0 0.0
    %85 = vmatprep.subr.mxu0 0.0
    %86 = vmatpush1.msra.mxu0 0.0
    %87 = vmatprep.subr.mxu0 0.0
    %88 = vmatpush1.msra.mxu0 0.0
    %89 = vmatprep.subr.mxu0 0.0
    %90 = vmatpush1.msra.mxu0 0.0
    %91 = vmatprep.subr.mxu0 0.0
    %92 = vmatpush1.msra.mxu0 0.0
    %93 = vmatprep.subr.mxu0 0.0
    %94 = vmatpush1.msra.mxu0 0.0
    %95 = vmatprep.subr.mxu0 0.0
    %96 = vmatpush1.msra.mxu0 0.0
    %97 = vmatprep.subr.mxu0 0.0
    %98 = vmatpush1.msra.mxu0 0.0
    %99 = vmatprep.subr.mxu0 0.0
    %100 = vmatpush1.msra.mxu0 0.0
    %101 = vmatprep.subr.mxu0 0.0
    %102 = vmatpush1.msra.mxu0 0.0
    %103 = vmatprep.subr.mxu0 0.0
    %104 = vmatpush1.msra.mxu0 0.0
    %105 = vmatprep.mubr.f32.mxu0 0.0
    %106 = vmatmul.mubr.f32.gmra.mrb[0].mxu0 %v36
    %v107 = vpop.f32.mrb[0].mxu0
    %v108 = vadd.f32 %v32, %v107
    %v109 = vpop.f32.mrb[0].mxu0
    %110 = vmatprep.mubr.f32.mxu0 0.0
    %111 = vmatmul.mubr.f32.gmra.mrb[0].mxu0 %v39
    %v112 = vpop.f32.mrb[0].mxu0
    %v113 = vadd.f32 %v32, %v112
    %v114 = vpop.f32.mrb[0].mxu0
    %115 = vdwg.mxu0
    %v116 = vmul.f32 %v108, 0.5
    %v117 = vmul.f32 %v113, 0.5
    %v118 = vmul.f32 %v108, 0.70710677
    %v119 = vmul.f32 %v113, 0.70710677
    %v120 = verf.f32.pop %v118
    %v121 = verf.f32.pop %v119
    %v122 = vadd.f32 %v120, 1.0
    %v123 = vadd.f32 %v121, 1.0
    %v124 = vmul.f32 %v116, %v122
    %v125 = vmul.f32 %v117, %v123
    %v126 = vld [vmem:[%s3] sm:$0xff]
    %v127 = vld [vmem:[%s3 + $0x8] sm:$0xff]
    %v128 = vld [vmem:[%s3 + $0x10] sm:$0xff]
    %v129 = vld [vmem:[%s3 + $0x18] sm:$0xff]
    %v130 = vld [vmem:[%s3 + $0x20] sm:$0xff]
    %v131 = vld [vmem:[%s3 + $0x28] sm:$0xff]
    %v132 = vld [vmem:[%s3 + $0x30] sm:$0xff]
    %v133 = vld [vmem:[%s3 + $0x38] sm:$0xff]
    %vm134 = vcmask 523264
    %v136 = vsel %vm134, %v124, 0
    %v139 = vsel %vm134, %v125, 0
    %141 = vmatprep.subr.mxu0 0.0
    %142 = vmatpush1.msra.mxu0 %v126
    %143 = vmatprep.subr.mxu0 0.0
    %144 = vmatpush1.msra.mxu0 %v127
    %145 = vmatprep.subr.mxu0 0.0
    %146 = vmatpush1.msra.mxu0 %v128
    %147 = vmatprep.subr.mxu0 0.0
    %148 = vmatpush1.msra.mxu0 %v129
    %149 = vmatprep.subr.mxu0 0.0
    %150 = vmatpush1.msra.mxu0 %v130
    %151 = vmatprep.subr.mxu0 0.0
    %152 = vmatpush1.msra.mxu0 %v131
    %153 = vmatprep.subr.mxu0 0.0
    %154 = vmatpush1.msra.mxu0 %v132
    %155 = vmatprep.subr.mxu0 0.0
    %156 = vmatpush1.msra.mxu0 %v133
    %157 = vmatprep.subr.mxu0 0.0
    %158 = vmatpush1.msra.mxu0 0.0
    %159 = vmatprep.subr.mxu0 0.0
    %160 = vmatpush1.msra.mxu0 0.0
    %161 = vmatprep.subr.mxu0 0.0
    %162 = vmatpush1.msra.mxu0 0.0
    %163 = vmatprep.subr.mxu0 0.0
    %164 = vmatpush1.msra.mxu0 0.0
    %165 = vmatprep.subr.mxu0 0.0
    %166 = vmatpush1.msra.mxu0 0.0
    %167 = vmatprep.subr.mxu0 0.0
    %168 = vmatpush1.msra.mxu0 0.0
    %169 = vmatprep.subr.mxu0 0.0
    %170 = vmatpush1.msra.mxu0 0.0
    %171 = vmatprep.subr.mxu0 0.0
    %172 = vmatpush1.msra.mxu0 0.0
    %173 = vmatprep.subr.mxu0 0.0
    %174 = vmatpush1.msra.mxu0 0.0
    %175 = vmatprep.subr.mxu0 0.0
    %176 = vmatpush1.msra.mxu0 0.0
    %177 = vmatprep.subr.mxu0 0.0
    %178 = vmatpush1.msra.mxu0 0.0
    %179 = vmatprep.subr.mxu0 0.0
    %180 = vmatpush1.msra.mxu0 0.0
    %181 = vmatprep.subr.mxu0 0.0
    %182 = vmatpush1.msra.mxu0 0.0
    %183 = vmatprep.subr.mxu0 0.0
    %184 = vmatpush1.msra.mxu0 0.0
    %185 = vmatprep.subr.mxu0 0.0
    %186 = vmatpush1.msra.mxu0 0.0
    %187 = vmatprep.subr.mxu0 0.0
    %188 = vmatpush1.msra.mxu0 0.0
    %189 = vmatprep.subr.mxu0 0.0
    %190 = vmatpush1.msra.mxu0 0.0
    %191 = vmatprep.subr.mxu0 0.0
    %192 = vmatpush1.msra.mxu0 0.0
    %193 = vmatprep.subr.mxu0 0.0
    %194 = vmatpush1.msra.mxu0 0.0
    %195 = vmatprep.subr.mxu0 0.0
    %196 = vmatpush1.msra.mxu0 0.0
    %197 = vmatprep.subr.mxu0 0.0
    %198 = vmatpush1.msra.mxu0 0.0
    %199 = vmatprep.subr.mxu0 0.0
    %200 = vmatpush1.msra.mxu0 0.0
    %201 = vmatprep.subr.mxu0 0.0
    %202 = vmatpush1.msra.mxu0 0.0
    %203 = vmatprep.subr.mxu0 0.0
    %204 = vmatpush1.msra.mxu0 0.0
    %205 = vmatprep.mubr.f32.mxu0 0.0
    %206 = vmatmul.mubr.f32.gmra.mrb[0].mxu0 %v136
    %v207 = vpop.f32.mrb[0].mxu0
    %v208 = vadd.f32 0.0, %v207
    %v209 = vpop.f32.mrb[0].mxu0
    %210 = vmatprep.mubr.f32.mxu0 0.0
    %211 = vmatmul.mubr.f32.gmra.mrb[0].mxu0 %v139
    %v212 = vpop.f32.mrb[0].mxu0
    %v213 = vadd.f32 0.0, %v212
    %v214 = vpop.f32.mrb[0].mxu0
    %215 = vdwg.mxu0
    %p216 = scmp.eq.s32.totalorder 0, 0
    // Predicated region
    $region22: #{tpu_custom_call.1} parent=1 // pred_check
      %p217 = pneg %p216
    $region23: #{tpu_custom_call.1} parent=1 // pred_check_branch
      %219 = sbr.rel (%p217) target = $region25
    $region24: #{tpu_custom_call.1} parent=1 // pred_region
      %v220 = vld [vmem:[%s4] sm:$0x1]
      %v222 = vlaneseq
      %v223 = vshrl.u32 %v222, 7
      %v224 = vsub.s32 0, %v223
      %v225 = vrot.slane %v220, %v224
      %v227 = vadd.f32 %v208, %v225
      %v228 = vadd.f32 %v213, %v225
      %229 = vst.msk [vmem:[#allocation2] sm:$0xff] %vm34, %v227
      %230 = vst.msk [vmem:[#allocation2 + $0x8] sm:$0xff] %vm34, %v228
    $region25: #{tpu_custom_call.1} parent=1 // pred_fallthru
      _
    %p231 = scmp.gt.s32.totalorder 0, 0
    // Predicated region
    $region26: #{tpu_custom_call.1} parent=1 // pred_check
      %p232 = pneg %p231
    $region27: #{tpu_custom_call.1} parent=1 // pred_check_branch
      %234 = sbr.rel (%p232) target = $region29
    $region28: #{tpu_custom_call.1} parent=1 // pred_region
      %v235 = vld [vmem:[#allocation2] sm:$0xff]
      %v236 = vld [vmem:[#allocation2 + $0x8] sm:$0xff]
      %v237 = vadd.f32 %v235, %v208
      %v238 = vadd.f32 %v236, %v213
      %239 = vst.msk [vmem:[#allocation2] sm:$0xff] %vm34, %v237
      %240 = vst.msk [vmem:[#allocation2 + $0x8] sm:$0xff] %vm34, %v238
    $region29: #{tpu_custom_call.1} parent=1 // pred_fallthru
      _
    // Predicated region
    $region30: #{tpu_custom_call.1} parent=1 // pred_check
      _
    $region31: #{tpu_custom_call.1} parent=1 // pred_check_branch
      %242 = sbr.rel (0) target = $region33
    $region32: #{tpu_custom_call.1} parent=1 // pred_region
      %s244 = ssub.s32 256, 256
      %245 = vsyncadd [#allocation3], %s244
      %s246 = sshll.u32 [#allocation2], 4
      %s247 = int_to_ptr.vmem [resolvable:$true] %s246
      %252 = dma.vmem_to_hbm [thread:$0]  %s247, 256, %s5, [#allocation3], 128, 128, 8
    $region33: #{tpu_custom_call.1} parent=1 // pred_fallthru
      _
    // Predicated region
    $region34: #{tpu_custom_call.1} parent=1 // pred_check
      _
    $region35: #{tpu_custom_call.1} parent=1 // pred_check_branch
      %254 = sbr.rel (0) target = $region37
    $region36: #{tpu_custom_call.1} parent=1 // pred_region
      %255 = dma.done [#allocation3], 256
    $region37: #{tpu_custom_call.1} parent=1 // pred_fallthru
      _
    %256 = vsyncpa [#allocation3], 1

</llo_original>
